<compile_context>
chip_gen: v5e
topology: v5e:2x2
jax: 0.10.0
libtpu: 0.0.40
codegen_flags: <defaults>
</compile_context>

<pallas_src>
import functools
import math

import jax
import jax.numpy as jnp
from jax.experimental import pallas as pl
from jax.experimental.pallas import tpu as pltpu

# ArcMarginProduct hyper-parameters (AngularModel defaults: scale=30, margin=0.3)
_SCALE = 30.0
_MARGIN = 0.3
_COS_M = math.cos(_MARGIN)
_SIN_M = math.sin(_MARGIN)
_TH = math.cos(math.pi - _MARGIN)
_MM = math.sin(math.pi - _MARGIN) * _MARGIN

_GEM_EPS = 1e-6
_BN_EPS = 1e-5
_NORM_EPS = 1e-12


# --------------------------------------------------------------------------
# Kernel 1: GeM pooling + (BN-folded) fc + L2 normalization -> fn (TB, F)
#   Batch-tiled: block (TB, C, H*W); spatial sits on the lane axis so the GeM
#   reduction is a single lane reduce on the already-resident tile.
# --------------------------------------------------------------------------
def feat_kernel(x_ref, wfc_ref, bfc_ref, fn_ref, *, p):
    x = x_ref[...].astype(jnp.float32)          # accepts bf16 or f32 activations
    xc = jnp.maximum(x, _GEM_EPS)
    if p == 3.0:
        # integer cube: pure VPU multiplies, no exp/log on the big tensor
        xp = xc * xc * xc
    else:
        # TODO(synk): learnable GeM p is treated as a static inference-time constant.
        xp = xc ** p
    pooled = jnp.mean(xp, axis=-1) ** (1.0 / p)            # (TB, C), tiny pow

    # dropout(p=0.0) is identity; eval-mode BatchNorm1d is folded into fc (wrapper).
    feat = jnp.dot(pooled, wfc_ref[...],
                   preferred_element_type=jnp.float32)      # (TB, F)
    feat = feat + bfc_ref[...]                              # (1, F)

    # F.normalize(feat) in f32, then emit in the ArcMargin compute dtype (bf16).
    fnorm = jnp.sqrt(jnp.sum(feat * feat, axis=-1, keepdims=True))
    fn = feat / jnp.maximum(fnorm, _NORM_EPS)
    fn_ref[...] = fn.astype(fn_ref.dtype)


# --------------------------------------------------------------------------
# Kernel 2: ArcMargin over one wide tile of n_classes (grid axis 0)
#   lab_sm_ref : (B,) int32 labels in SMEM (scalar prefetch) -> pl.when gate
#   label_ref  : (B,1) int32 labels in VMEM -> vectorized one-hot compare
#   wn_ref     : (F, TN) pre-normalized weight tile (bf16 or int8)
#   scale_ref  : (1, TN) per-class dequant scale (only when quantized)
# --------------------------------------------------------------------------
def arc_kernel(lab_sm_ref, label_ref, fn_ref, wn_ref, *rest, quantized, batch):
    if quantized:
        scale_ref, out_ref = rest
    else:
        (out_ref,) = rest

    tn = out_ref.shape[1]
    col0 = pl.program_id(0) * tn

    fn = fn_ref[...]                                   # (B, F) bf16, resident
    w = wn_ref[...]
    if w.dtype != fn.dtype:
        w = w.astype(fn.dtype)                         # int8/fp8 -> bf16 dequant cast
    cosine = jnp.dot(fn, w, preferred_element_type=jnp.float32)     # (B, TN)
    if quantized:
        cosine = cosine * scale_ref[...]               # per-class scale (1, TN)

    # Scalar-side gate: does this class tile contain any of the B labels?
    has_label = False
    for b in range(batch):
        lb = lab_sm_ref[b]
        has_label = jnp.logical_or(
            has_label, jnp.logical_and(lb >= col0, lb < col0 + tn))

    @pl.when(has_label)
    def _():
        # margin epilogue only where a label column actually lives
        sine = jnp.sqrt(jnp.maximum(1.0 - cosine * cosine, 0.0))   # clamp: no NaN
        phi = cosine * _COS_M - sine * _SIN_M
        phi = jnp.where(cosine > _TH, phi, cosine - _MM)           # easy_margin=False
        col = jax.lax.broadcasted_iota(jnp.int32, cosine.shape, 1)
        out_ref[...] = jnp.where(col == (label_ref[...] - col0), phi, cosine) * _SCALE

    @pl.when(jnp.logical_not(has_label))
    def _():
        out_ref[...] = cosine * _SCALE


# --------------------------------------------------------------------------
# Wrapper
# --------------------------------------------------------------------------
def angular_model_forward(x_nchw, label, params, *, tn=512, tb=8,
                          weights_dtype=jnp.bfloat16):
    """x_nchw: backbone feature map (B, C, H, W) (f32 or bf16); label: (B,) ints."""
    B, C, H, W = x_nchw.shape
    HW = H * W
    # (B, C, H, W) -> (B, C, H*W): free reshape, no HBM transpose / dtype cast.
    x = x_nchw.reshape(B, C, HW)

    p = float(params["p_gem"])

    # ---- constant-weight preprocessing (done once, outside the kernels) ----
    gamma = params["bn_gamma"].astype(jnp.float32)
    beta = params["bn_beta"].astype(jnp.float32)
    mean = params["bn_mean"].astype(jnp.float32)
    var = params["bn_var"].astype(jnp.float32)
    bn_scale = gamma / jnp.sqrt(var + _BN_EPS)                        # (F,)
    w_fc_t = params["w_fc"].T.astype(jnp.float32) * bn_scale[None, :]  # (C, F)
    b_fc = ((params["b_fc"].reshape(-1).astype(jnp.float32) - mean)
            * bn_scale + beta).reshape(1, -1)                          # (1, F)
    F_dim = w_fc_t.shape[1]

    # Pre-normalize + pre-transpose ArcMargin weight.
    w_arc = params["w_arc"].astype(jnp.float32)                       # (n_classes, F)
    n_classes = w_arc.shape[0]
    wnorm = jnp.sqrt(jnp.sum(w_arc * w_arc, axis=1, keepdims=True))
    wn_t = (w_arc / jnp.maximum(wnorm, _NORM_EPS)).T                  # (F, n_classes)

    ncp = pl.cdiv(n_classes, tn) * tn
    if ncp != n_classes:
        wn_t = jnp.pad(wn_t, ((0, 0), (0, ncp - n_classes)))

    quantized = jnp.dtype(weights_dtype) == jnp.dtype(jnp.int8)
    if quantized:
        # int8 stream (v5e/v6e): per-class symmetric scale folded into the epilogue.
        absmax = jnp.max(jnp.abs(wn_t), axis=0, keepdims=True)        # (1, ncp)
        w_scale = (jnp.maximum(absmax, 1e-6) / 127.0).astype(jnp.float32)
        wn_stream = jnp.clip(jnp.round(wn_t / w_scale), -127, 127).astype(jnp.int8)
    else:
        wn_stream = wn_t.astype(weights_dtype)                        # bf16 (or fp8 on v7x)

    label_sm = label.reshape(-1).astype(jnp.int32)                    # (B,)  SMEM gate
    label2 = label_sm.reshape(B, 1)                                   # (B,1) VMEM compare
    compute_dtype = jnp.bfloat16

    # ---- stage 1: features, batch-tiled for pipelined activation DMA ----
    tb_eff = tb if (B % tb == 0 and tb % 8 == 0) else B
    fn = pl.pallas_call(
        functools.partial(feat_kernel, p=p),
        out_shape=jax.ShapeDtypeStruct((B, F_dim), compute_dtype),
        grid_spec=pltpu.PrefetchScalarGridSpec(
            num_scalar_prefetch=0,
            grid=(B // tb_eff,),
            in_specs=[
                pl.BlockSpec((tb_eff, C, HW), lambda i: (i, 0, 0)),   # streamed
                pl.BlockSpec((C, F_dim), lambda i: (0, 0)),           # resident
                pl.BlockSpec((1, F_dim), lambda i: (0, 0)),           # resident
            ],
            out_specs=pl.BlockSpec((tb_eff, F_dim), lambda i: (i, 0)),
        ),
        compiler_params=pltpu.CompilerParams(
            dimension_semantics=("parallel",),
            vmem_limit_bytes=32 * 1024 * 1024),
        cost_estimate=pl.CostEstimate(
            flops=int(2 * B * C * F_dim + 4 * B * HW * C),
            transcendentals=int(2 * B * C),
            bytes_accessed=int(x.size * x.dtype.itemsize
                               + 4 * C * F_dim + 2 * B * F_dim)),
    )(x, w_fc_t, b_fc)

    # ---- stage 2: ArcMargin, wide class tiles, labels scalar-prefetched ----
    arc_inputs = [label_sm, label2, fn, wn_stream]
    in_specs = [
        pl.BlockSpec((B, 1), lambda j, lab: (0, 0)),          # label (resident)
        pl.BlockSpec((B, F_dim), lambda j, lab: (0, 0)),      # fn    (resident, bf16)
        pl.BlockSpec((F_dim, tn), lambda j, lab: (0, j),      # weight slab (streamed)
                     pipeline_mode=pl.Buffered(3)),
    ]
    if quantized:
        arc_inputs.append(w_scale)
        in_specs.append(pl.BlockSpec((1, tn), lambda j, lab: (0, j)))

    logits = pl.pallas_call(
        functools.partial(arc_kernel, quantized=bool(quantized), batch=B),
        out_shape=jax.ShapeDtypeStruct((B, ncp), jnp.float32),
        grid_spec=pltpu.PrefetchScalarGridSpec(
            num_scalar_prefetch=1,
            grid=(ncp // tn,),
            in_specs=in_specs,
            out_specs=pl.BlockSpec((B, tn), lambda j, lab: (0, j)),
        ),
        compiler_params=pltpu.CompilerParams(
            dimension_semantics=("parallel",),
            vmem_limit_bytes=32 * 1024 * 1024),
        cost_estimate=pl.CostEstimate(
            flops=int(2 * B * F_dim * ncp),
            transcendentals=int(B * tn),   # only label-holding tiles run the sqrt
            bytes_accessed=int(wn_stream.size * wn_stream.dtype.itemsize
                               + 4 * B * ncp)),
    )(*arc_inputs)

    if ncp != n_classes:
        logits = logits[:, :n_classes]
    return logits


# --------------------------------------------------------------------------
# Pure-JAX reference (matches the PyTorch forward, eval-mode BN) for checking
# --------------------------------------------------------------------------
def reference_forward(x_nchw, label, params):
    xf = x_nchw.astype(jnp.float32)
    p = float(params["p_gem"])
    pooled = jnp.mean(jnp.maximum(xf, _GEM_EPS) ** p, axis=(2, 3)) ** (1.0 / p)
    feat = pooled @ params["w_fc"].T + params["b_fc"]
    feat = ((feat - params["bn_mean"]) / jnp.sqrt(params["bn_var"] + _BN_EPS)
            * params["bn_gamma"] + params["bn_beta"])
    fn = feat / jnp.maximum(
        jnp.sqrt(jnp.sum(feat * feat, axis=1, keepdims=True)), _NORM_EPS)
    wn = params["w_arc"] / jnp.maximum(
        jnp.sqrt(jnp.sum(params["w_arc"] ** 2, axis=1, keepdims=True)), _NORM_EPS)
    cosine = fn @ wn.T
    sine = jnp.sqrt(jnp.maximum(1.0 - cosine ** 2, 0.0))
    phi = cosine * _COS_M - sine * _SIN_M
    phi = jnp.where(cosine > _TH, phi, cosine - _MM)
    one_hot = jax.nn.one_hot(label, cosine.shape[1], dtype=cosine.dtype)
    return (one_hot * phi + (1.0 - one_hot) * cosine) * _SCALE


# --------------------------------------------------------------------------
# Parameter init matching the PyTorch module (_init_params + defaults)
# --------------------------------------------------------------------------
def init_params(key, in_feat, fc_dim, n_classes):
    k_fc, k_arc = jax.random.split(key)
    std_fc = math.sqrt(2.0 / (in_feat + fc_dim))
    w_fc = std_fc * jax.random.normal(k_fc, (fc_dim, in_feat), jnp.float32)
    b_fc = jnp.zeros((fc_dim,), jnp.float32)
    bn_gamma = jnp.ones((fc_dim,), jnp.float32)
    bn_beta = jnp.zeros((fc_dim,), jnp.float32)
    bn_mean = jnp.zeros((fc_dim,), jnp.float32)
    bn_var = jnp.ones((fc_dim,), jnp.float32)
    bound = math.sqrt(6.0 / (fc_dim + n_classes))
    w_arc = jax.random.uniform(k_arc, (n_classes, fc_dim), jnp.float32,
                               minval=-bound, maxval=bound)
    return {
        "p_gem": 3.0,
        "w_fc": w_fc,
        "b_fc": b_fc,
        "bn_gamma": bn_gamma,
        "bn_beta": bn_beta,
        "bn_mean": bn_mean,
        "bn_var": bn_var,
        "w_arc": w_arc,
    }


if __name__ == "__main__":
    # Small shapes: backbone feature map (B=16, C_feat=64, H=W=8), fc_dim=128,
    # n_classes=2048 -> arc grid = 4 tiles of tn=512; batch grid = 2 tiles of tb=8.
    B, C, H, W = 16, 64, 8, 8
    FC_DIM, N_CLASSES = 128, 2048

    key = jax.random.PRNGKey(0)
    k_x, k_lbl, k_p = jax.random.split(key, 3)

    x = jax.random.normal(k_x, (B, C, H, W), jnp.float32)
    label = jax.random.randint(k_lbl, (B,), 0, N_CLASSES, jnp.int32)
    params = init_params(k_p, C, FC_DIM, N_CLASSES)

    ref = reference_forward(x, label, params)

    # bf16 weight stream (default; fp8 on v7x would pass a float8 dtype here)
    logits = angular_model_forward(x, label, params)
    jax.block_until_ready(logits)
    assert logits.shape == (B, N_CLASSES) and logits.dtype == jnp.float32
    assert bool(jnp.all(jnp.isfinite(logits)))
    assert float(jnp.max(jnp.abs(logits - ref))) < 0.5, "bf16 path mismatch vs reference"

    # int8 weight stream (v5e/v6e bandwidth path)
    logits_i8 = angular_model_forward(x, label, params, weights_dtype=jnp.int8)
    jax.block_until_ready(logits_i8)
    assert bool(jnp.all(jnp.isfinite(logits_i8)))
    assert float(jnp.max(jnp.abs(logits_i8 - ref))) < 1.0, "int8 path mismatch vs reference"

    print("KERNEL_OK")
</pallas_src>

<mosaic_0001>
module attributes {stable_mosaic.version = 11 : i64} {
  func.func @feat_kernel(%arg0: i32, %arg1: memref<8x64x64xf32, #tpu.memory_space<vmem>>, %arg2: memref<64x128xf32, #tpu.memory_space<vmem>>, %arg3: memref<1x128xf32, #tpu.memory_space<vmem>>, %arg4: memref<8x128xbf16, #tpu.memory_space<vmem>>) attributes {dimension_semantics = [#tpu.dimension_semantics<parallel>], iteration_bounds = array<i64: 2>, scalar_prefetch = 0 : i64, scratch_operands = 0 : i64, tpu.core_type = #tpu.core_type<tc>, window_params = [{transform_indices = @transform_0, window_bounds = array<i64: 8, 64, 64>}, {pipeline_mode = #tpu.pipeline_mode<synchronous>, transform_indices = @transform_1, window_bounds = array<i64: 64, 128>}, {pipeline_mode = #tpu.pipeline_mode<synchronous>, transform_indices = @transform_2, window_bounds = array<i64: 1, 128>}, {transform_indices = @transform_3, window_bounds = array<i64: 8, 128>}]} {
    %c0 = arith.constant 0 : index
    %c0_0 = arith.constant 0 : index
    %c0_1 = arith.constant 0 : index
    %0 = vector.load %arg1[%c0, %c0_0, %c0_1] : memref<8x64x64xf32, #tpu.memory_space<vmem>>, vector<8x64x64xf32>
    %cst = arith.constant 9.99999997E-7 : f32
    %1 = vector.broadcast %cst : f32 to vector<8x64x64xf32>
    %2 = arith.maximumf %0, %1 : vector<8x64x64xf32>
    %3 = arith.mulf %2, %2 : vector<8x64x64xf32>
    %4 = arith.mulf %3, %2 : vector<8x64x64xf32>
    %cst_2 = arith.constant dense<0.000000e+00> : vector<8x64xf32>
    %5 = vector.multi_reduction <add>, %4, %cst_2 [2] : vector<8x64x64xf32> to vector<8x64xf32>
    %cst_3 = arith.constant 6.400000e+01 : f32
    %6 = vector.broadcast %cst_3 : f32 to vector<8x64xf32>
    %7 = arith.divf %5, %6 : vector<8x64xf32>
    %cst_4 = arith.constant 0.333333343 : f32
    %8 = vector.broadcast %cst_4 : f32 to vector<8x64xf32>
    %9 = math.powf %7, %8 : vector<8x64xf32>
    %c0_5 = arith.constant 0 : index
    %c0_6 = arith.constant 0 : index
    %10 = vector.load %arg2[%c0_5, %c0_6] : memref<64x128xf32, #tpu.memory_space<vmem>>, vector<64x128xf32>
    %cst_7 = arith.constant dense<0.000000e+00> : vector<8x128xf32>
    %11 = tpu.matmul %9, %10, %cst_7 {dimension_numbers = #tpu.dot_dimension_numbers<[1], [0], [0], [1], [0, 0, 1, 1], [], []>} : vector<8x64xf32>, vector<64x128xf32>, vector<8x128xf32> -> vector<8x128xf32>
    %c0_8 = arith.constant 0 : index
    %c0_9 = arith.constant 0 : index
    %12 = vector.load %arg3[%c0_8, %c0_9] : memref<1x128xf32, #tpu.memory_space<vmem>>, vector<1x128xf32>
    %13 = vector.broadcast %12 : vector<1x128xf32> to vector<8x128xf32>
    %14 = arith.addf %11, %13 : vector<8x128xf32>
    %15 = arith.mulf %14, %14 : vector<8x128xf32>
    %cst_10 = arith.constant dense<0.000000e+00> : vector<8xf32>
    %16 = vector.multi_reduction <add>, %15, %cst_10 [1] : vector<8x128xf32> to vector<8xf32>
    %17 = vector.shape_cast %16 : vector<8xf32> to vector<8x1xf32>
    %18 = math.sqrt %17 : vector<8x1xf32>
    %cst_11 = arith.constant 9.99999996E-13 : f32
    %19 = vector.broadcast %cst_11 : f32 to vector<8x1xf32>
    %20 = arith.maximumf %18, %19 : vector<8x1xf32>
    %21 = vector.broadcast %20 : vector<8x1xf32> to vector<8x128xf32>
    %22 = arith.divf %14, %21 : vector<8x128xf32>
    %23 = arith.truncf %22 : vector<8x128xf32> to vector<8x128xbf16>
    %c0_12 = arith.constant 0 : index
    %c0_13 = arith.constant 0 : index
    %24 = vector.load %arg4[%c0_12, %c0_13] : memref<8x128xbf16, #tpu.memory_space<vmem>>, vector<8x128xbf16>
    tpu.vector_store %arg4[%c0_12, %c0_13], %23 {strides = array<i32>} : memref<8x128xbf16, #tpu.memory_space<vmem>>, vector<8x128xbf16>,
    return
  }
  func.func @transform_0(%arg0: i32) -> (i32, i32, i32) {
    %c0_i32 = arith.constant 0 : i32
    %c0_i32_0 = arith.constant 0 : i32
    %c0_i32_1 = arith.constant 0 : i32
    return %arg0, %c0_i32, %c0_i32_0 : i32, i32, i32
  }
  func.func @transform_1(%arg0: i32) -> (i32, i32) {
    %c0_i32 = arith.constant 0 : i32
    %c0_i32_0 = arith.constant 0 : i32
    %c0_i32_1 = arith.constant 0 : i32
    return %c0_i32, %c0_i32_0 : i32, i32
  }
  func.func @transform_2(%arg0: i32) -> (i32, i32) {
    %c0_i32 = arith.constant 0 : i32
    %c0_i32_0 = arith.constant 0 : i32
    %c0_i32_1 = arith.constant 0 : i32
    return %c0_i32, %c0_i32_0 : i32, i32
  }
  func.func @transform_3(%arg0: i32) -> (i32, i32) {
    %c0_i32 = arith.constant 0 : i32
    %c0_i32_0 = arith.constant 0 : i32
    return %arg0, %c0_i32 : i32, i32
  }
}

</mosaic_0001>

<llo_original>
// kernel: tpu_custom_call.1
$region0: #{tpu_custom_call.1}
  #allocation0 [shape = 'u32[]', space=smem, size = 0x4, offset = 0x4, fixed_abs, tag = 'smem constant byte address 0x4 - core index']
  #allocation1 [shape = 'u32[72,128]{1,0:T(1,128)}', space=vmem, size = 0x9000, scoped, tag = 'internal scratch']
  %s0 = inlined_call_operand.hbm [shape: f32[16,64,64], index: 0, kind: input, shape index: {}]
  %s1 = inlined_call_operand.hbm [shape: f32[64,128], index: 1, kind: input, shape index: {}]
  %s2 = inlined_call_operand.vmem [shape: f32[1,128], index: 2, kind: input, shape index: {}]
  %s3 = inlined_call_operand.hbm [shape: bf16[16,128], index: 3, kind: output, shape index: {}]
  %s4 = sld [smem:[#allocation0]]
  $region53: #{tpu_custom_call.1} parent=0
    _
  %s6 = ssub.s32 1, %s4
  %s7 = scalar_select 0, %s6, %s4
  $region1: #{tpu_custom_call.1} parent=0
    #allocation2 [shape = 'u8[524288]{0}', space=vmem, size = 0x80000, scoped, tag = 'input window, operand 0']
    #allocation3 [shape = 's32[2]{0}', space=sflag, size = 0x8, scoped, tag = 'scoped memory for tpu_custom_call.1']
    #allocation4 [shape = 's32[2]{0}', space=sflag, size = 0x8, scoped, tag = 'scoped memory for tpu_custom_call.1']
    #allocation5 [shape = 'u8[32768]{0}', space=vmem, size = 0x8000, scoped, tag = 'input window, operand 1, single buffered']
    #allocation6 [shape = 's32[1]{0}', space=sflag, size = 0x4, scoped, tag = 'scoped memory for tpu_custom_call.1']
    #allocation7 [shape = 'u8[4096]{0}', space=vmem, size = 0x1000, scoped, tag = 'output window, operand 0']
    %8 = vsyncpa [#allocation3], 0
    %s9 = scalar_lea.sflag [#allocation3], 1
    %10 = vsyncpa %s9, 0
    %11 = vsyncpa [#allocation6], 0
    %12 = vsyncpa [#allocation4], 0
    %s13 = scalar_lea.sflag [#allocation4], 1
    %14 = vsyncpa %s13, 0
    loop: start=0, step=1, limit=4
    $region2: #{tpu_custom_call.1} parent=1 // loop_pre_header
      _
    $region3: #{tpu_custom_call.1} parent=1 // loop_header
      %s16 = sphi 0, %s20
      %p17 = scmp.ge.s32.totalorder %s16, 4
      %s26 = sphi 0, %s28
      %s29 = sphi 0, %s26
      %s30 = sphi 0, %s29
      %s46 = sphi 0, %s30
      %s50 = sphi 0, %s50
      %s52 = sphi 0, %s50
      %s53 = sphi 0, %s52
      %s67 = sphi 0, %s53
      %s71 = sphi 0, %s71
      %s73 = sphi 0, %s71
      %s74 = sphi 0, %s73
      %s88 = sphi 0, %s74
      %s94 = sphi 0, %s96
      %s97 = sphi 0, %s94
      %s98 = sphi 0, %s97
      %s114 = sphi 0, %s98
    $region4: #{tpu_custom_call.1} parent=1 // loop_header_branch
      %19 = sbr.rel (%p17) target = $region8
    $region5: #{tpu_custom_call.1} parent=1 // loop_body
      %s21 = ssub.s32 %s16, 1
      %s22 = ssub.s32 %s16, 2
      %s23 = sadd.s32 %s16, 1
      %s24 = ssub.s32 %s16, %s23
      %p25 = scmp.eq.s32.totalorder %s24, 0
      %s27 = sadd.s32 %s26, 1
      %s28 = scalar_select %p25, %s26, %s27
      %p31 = pneg %p25
      %p32 = scmp.eq.s32.totalorder %s16, 1
      %p33 = por %p31, %p32
      %p34 = scmp.ne.s32.totalorder %s26, %s29
      %p35 = scmp.eq.s32.totalorder %s16, 0
      %p36 = por %p34, %p35
      %p37 = scmp.ne.s32.totalorder %s26, %s29
      %p38 = scmp.eq.s32.totalorder %s21, 1
      %p39 = por %p37, %p38
      %p40 = scmp.ne.s32.totalorder %s29, %s30
      %p41 = scmp.eq.s32.totalorder %s21, 0
      %p42 = por %p40, %p41
      %p43 = scmp.ne.s32.totalorder %s29, %s30
      %p44 = scmp.eq.s32.totalorder %s22, 1
      %p45 = por %p43, %p44
      %p47 = scmp.ne.s32.totalorder %s30, %s46
      %p48 = scmp.eq.s32.totalorder %s22, 0
      %p49 = por %p47, %p48
      %s51 = sadd.s32 %s50, 1
      %p54 = scmp.eq.s32.totalorder %s16, 1
      %p55 = scmp.ne.s32.totalorder %s50, %s52
      %p56 = scmp.eq.s32.totalorder %s16, 0
      %p57 = por %p55, %p56
      %p58 = scmp.ne.s32.totalorder %s50, %s52
      %p59 = scmp.eq.s32.totalorder %s21, 1
      %p60 = por %p58, %p59
      %p61 = scmp.ne.s32.totalorder %s52, %s53
      %p62 = scmp.eq.s32.totalorder %s21, 0
      %p63 = por %p61, %p62
      %p64 = scmp.ne.s32.totalorder %s52, %s53
      %p65 = scmp.eq.s32.totalorder %s22, 1
      %p66 = por %p64, %p65
      %p68 = scmp.ne.s32.totalorder %s53, %s67
      %p69 = scmp.eq.s32.totalorder %s22, 0
      %p70 = por %p68, %p69
      %s72 = sadd.s32 %s71, 1
      %p75 = scmp.eq.s32.totalorder %s16, 1
      %p76 = scmp.ne.s32.totalorder %s71, %s73
      %p77 = scmp.eq.s32.totalorder %s16, 0
      %p78 = por %p76, %p77
      %p79 = scmp.ne.s32.totalorder %s71, %s73
      %p80 = scmp.eq.s32.totalorder %s21, 1
      %p81 = por %p79, %p80
      %p82 = scmp.ne.s32.totalorder %s73, %s74
      %p83 = scmp.eq.s32.totalorder %s21, 0
      %p84 = por %p82, %p83
      %p85 = scmp.ne.s32.totalorder %s73, %s74
      %p86 = scmp.eq.s32.totalorder %s22, 1
      %p87 = por %p85, %p86
      %p89 = scmp.ne.s32.totalorder %s74, %s88
      %p90 = scmp.eq.s32.totalorder %s22, 0
      %p91 = por %p89, %p90
      %s92 = ssub.s32 %s16, %s23
      %p93 = scmp.eq.s32.totalorder %s92, 0
      %s95 = sadd.s32 %s94, 1
      %s96 = scalar_select %p93, %s94, %s95
      %p99 = pneg %p93
      %p100 = scmp.eq.s32.totalorder %s16, 1
      %p101 = por %p99, %p100
      %p102 = scmp.ne.s32.totalorder %s94, %s97
      %p103 = scmp.eq.s32.totalorder %s16, 0
      %p104 = por %p102, %p103
      %p105 = scmp.ne.s32.totalorder %s94, %s97
      %p106 = scmp.eq.s32.totalorder %s21, 1
      %p107 = por %p105, %p106
      %p108 = scmp.ne.s32.totalorder %s97, %s98
      %p109 = scmp.eq.s32.totalorder %s21, 0
      %p110 = por %p108, %p109
      %p111 = scmp.ne.s32.totalorder %s97, %s98
      %p112 = scmp.eq.s32.totalorder %s22, 1
      %p113 = por %p111, %p112
      %p115 = scmp.ne.s32.totalorder %s98, %s114
      %p116 = scmp.eq.s32.totalorder %s22, 0
      %p117 = por %p115, %p116
      %p118 = scmp.le.s32.totalorder 1, %s16
      %p119 = scmp.lt.s32.totalorder %s16, 3
      %p120 = pnand %p118, %p119
      %p121 = pneg %p120
      // Predicated region
      $region9: #{tpu_custom_call.1} parent=5 // pred_check
        _
      $region10: #{tpu_custom_call.1} parent=5 // pred_check_branch
        %123 = sbr.rel (%p120) target = $region12
      $region11: #{tpu_custom_call.1} parent=5 // pred_region
        %s124 = ssub.s32 %s16, 1
        // Predicated region
        $region13: #{tpu_custom_call.1} parent=11 // pred_check
          %p125 = pneg %p63
        $region14: #{tpu_custom_call.1} parent=11 // pred_check_branch
          %127 = sbr.rel (%p125) target = $region16
        $region15: #{tpu_custom_call.1} parent=11 // pred_region
          %129 = vsyncadd [#allocation6], 0
          %s130 = sshll.u32 %s1, 4
          %s131 = int_to_ptr.hbm [resolvable:$true] %s130
          %s132 = sshll.u32 [#allocation5], 4
          %s133 = int_to_ptr.vmem [resolvable:$true] %s132
          %138 = dma.hbm_to_vmem [thread:$0]  %s131, 1024, %s133, [#allocation6], 128, 128, 8
        $region16: #{tpu_custom_call.1} parent=11 // pred_fallthru
          _
        // Predicated region
        $region17: #{tpu_custom_call.1} parent=11 // pred_check
          %p139 = pneg %p84
        $region18: #{tpu_custom_call.1} parent=11 // pred_check_branch
          %141 = sbr.rel (%p139) target = $region20
        $region19: #{tpu_custom_call.1} parent=11 // pred_region
          _
        $region20: #{tpu_custom_call.1} parent=11 // pred_fallthru
          _
      $region12: #{tpu_custom_call.1} parent=5 // pred_fallthru
        _
      %p142 = scmp.lt.s32.totalorder %s16, 2
      // Predicated region
      $region21: #{tpu_custom_call.1} parent=5 // pred_check
        %p143 = pneg %p142
      $region22: #{tpu_custom_call.1} parent=5 // pred_check_branch
        %145 = sbr.rel (%p143) target = $region24
      $region23: #{tpu_custom_call.1} parent=5 // pred_region
        // Predicated region
        $region25: #{tpu_custom_call.1} parent=23 // pred_check
          %p146 = pneg %p36
        $region26: #{tpu_custom_call.1} parent=23 // pred_check_branch
          %148 = sbr.rel (%p146) target = $region28
        $region27: #{tpu_custom_call.1} parent=23 // pred_region
          %s149 = sand.u32 %s26, 1
          %s150 = scalar_lea.sflag [#allocation3], %s149
          %s151 = sand.u32 %s26, 1
          %s152 = smul.addr %s151, 512
          %s153 = scalar_lea.vmem [#allocation2], %s152
          %s154 = smul.u32 8, %s16
          %156 = vsyncadd %s150, 0
          %s157 = smul.addr %s154, 8
          %s158 = smul.addr %s157, 8
          %s159 = scalar_lea.hbm %s0, %s158
          %s160 = sshll.u32 %s159, 4
          %s161 = int_to_ptr.hbm [resolvable:$true] %s160
          %s162 = sshll.u32 %s153, 4
          %s163 = int_to_ptr.vmem [resolvable:$true] %s162
          %168 = dma.hbm_to_vmem [thread:$0]  %s161, 8192, %s163, %s150, 128, 128, 8
        $region28: #{tpu_custom_call.1} parent=23 // pred_fallthru
          _
      $region24: #{tpu_custom_call.1} parent=5 // pred_fallthru
        _
      %p169 = scmp.le.s32.totalorder 1, %s16
      %p170 = scmp.lt.s32.totalorder %s16, 3
      %p171 = pnand %p169, %p170
      %p172 = pneg %p171
      // Predicated region
      $region29: #{tpu_custom_call.1} parent=5 // pred_check
        _
      $region30: #{tpu_custom_call.1} parent=5 // pred_check_branch
        %174 = sbr.rel (%p171) target = $region32
      $region31: #{tpu_custom_call.1} parent=5 // pred_region
        %s175 = ssub.s32 %s16, 1
        %s176 = sand.u32 %s29, 1
        %s177 = scalar_lea.sflag [#allocation3], %s176
        %s178 = sand.u32 %s29, 1
        %s179 = smul.addr %s178, 512
        %s180 = scalar_lea.vmem [#allocation2], %s179
        // Predicated region
        $region33: #{tpu_custom_call.1} parent=31 // pred_check
          %p181 = pneg %p42
        $region34: #{tpu_custom_call.1} parent=31 // pred_check_branch
          %183 = sbr.rel (%p181) target = $region36
        $region35: #{tpu_custom_call.1} parent=31 // pred_region
          %185 = dma.done %s177, 8192
        $region36: #{tpu_custom_call.1} parent=31 // pred_fallthru
          _
        // Predicated region
        $region37: #{tpu_custom_call.1} parent=31 // pred_check
          %p186 = pneg %p63
        $region38: #{tpu_custom_call.1} parent=31 // pred_check_branch
          %188 = sbr.rel (%p186) target = $region40
        $region39: #{tpu_custom_call.1} parent=31 // pred_region
          %190 = dma.done [#allocation6], 1024
        $region40: #{tpu_custom_call.1} parent=31 // pred_fallthru
          _
        %s191 = sand.u32 %s29, 1
        %s192 = scalar_lea.sflag [#allocation3], %s191
        %s193 = sand.u32 %s29, 1
        %s194 = smul.addr %s193, 512
        %s195 = scalar_lea.vmem [#allocation2], %s194
        %p196 = pneg %p42
        %p197 = pneg %p39
        %p198 = pneg %p63
        %p199 = pneg %p60
        %p200 = pneg %p84
        %p201 = pneg %p81
        %p202 = pneg %p110
        %p203 = pneg %p107
        %s204 = sand.u32 %s97, 1
        %s205 = scalar_lea.sflag [#allocation4], %s204
        %s206 = sand.u32 %s97, 1
        %s207 = smul.addr %s206, 4
        %s208 = scalar_lea.vmem [#allocation7], %s207
        %s209 = smul.u32 8, %s21
        %v210 = vld [vmem:[%s180] sm:$0xff]
        %v211 = vld [vmem:[%s180 + $0x8] sm:$0xff]
        %v212 = vld [vmem:[%s180 + $0x10] sm:$0xff]
        %v213 = vld [vmem:[%s180 + $0x18] sm:$0xff]
        %v214 = vld [vmem:[%s180 + $0x20] sm:$0xff]
        %v215 = vld [vmem:[%s180 + $0x28] sm:$0xff]
        %v216 = vld [vmem:[%s180 + $0x30] sm:$0xff]
        %v217 = vld [vmem:[%s180 + $0x38] sm:$0xff]
        %v218 = vld [vmem:[%s180 + $0x40] sm:$0xff]
        %v219 = vld [vmem:[%s180 + $0x48] sm:$0xff]
        %v220 = vld [vmem:[%s180 + $0x50] sm:$0xff]
        %v221 = vld [vmem:[%s180 + $0x58] sm:$0xff]
        %v222 = vld [vmem:[%s180 + $0x60] sm:$0xff]
        %v223 = vld [vmem:[%s180 + $0x68] sm:$0xff]
        %v224 = vld [vmem:[%s180 + $0x70] sm:$0xff]
        %v225 = vld [vmem:[%s180 + $0x78] sm:$0xff]
        %v226 = vld [vmem:[%s180 + $0x80] sm:$0xff]
        %v227 = vld [vmem:[%s180 + $0x88] sm:$0xff]
        %v228 = vld [vmem:[%s180 + $0x90] sm:$0xff]
        %v229 = vld [vmem:[%s180 + $0x98] sm:$0xff]
        %v230 = vld [vmem:[%s180 + $0xa0] sm:$0xff]
        %v231 = vld [vmem:[%s180 + $0xa8] sm:$0xff]
        %v232 = vld [vmem:[%s180 + $0xb0] sm:$0xff]
        %v233 = vld [vmem:[%s180 + $0xb8] sm:$0xff]
        %v234 = vld [vmem:[%s180 + $0xc0] sm:$0xff]
        %v235 = vld [vmem:[%s180 + $0xc8] sm:$0xff]
        %v236 = vld [vmem:[%s180 + $0xd0] sm:$0xff]
        %v237 = vld [vmem:[%s180 + $0xd8] sm:$0xff]
        %v238 = vld [vmem:[%s180 + $0xe0] sm:$0xff]
        %v239 = vld [vmem:[%s180 + $0xe8] sm:$0xff]
        %v240 = vld [vmem:[%s180 + $0xf0] sm:$0xff]
        %v241 = vld [vmem:[%s180 + $0xf8] sm:$0xff]
        %v242 = vld [vmem:[%s180 + $0x100] sm:$0xff]
        %v243 = vld [vmem:[%s180 + $0x108] sm:$0xff]
        %v244 = vld [vmem:[%s180 + $0x110] sm:$0xff]
        %v245 = vld [vmem:[%s180 + $0x118] sm:$0xff]
        %v246 = vld [vmem:[%s180 + $0x120] sm:$0xff]
        %v247 = vld [vmem:[%s180 + $0x128] sm:$0xff]
        %v248 = vld [vmem:[%s180 + $0x130] sm:$0xff]
        %v249 = vld [vmem:[%s180 + $0x138] sm:$0xff]
        %v250 = vld [vmem:[%s180 + $0x140] sm:$0xff]
        %v251 = vld [vmem:[%s180 + $0x148] sm:$0xff]
        %v252 = vld [vmem:[%s180 + $0x150] sm:$0xff]
        %v253 = vld [vmem:[%s180 + $0x158] sm:$0xff]
        %v254 = vld [vmem:[%s180 + $0x160] sm:$0xff]
        %v255 = vld [vmem:[%s180 + $0x168] sm:$0xff]
        %v256 = vld [vmem:[%s180 + $0x170] sm:$0xff]
        %v257 = vld [vmem:[%s180 + $0x178] sm:$0xff]
        %v258 = vld [vmem:[%s180 + $0x180] sm:$0xff]
        %v259 = vld [vmem:[%s180 + $0x188] sm:$0xff]
        %v260 = vld [vmem:[%s180 + $0x190] sm:$0xff]
        %v261 = vld [vmem:[%s180 + $0x198] sm:$0xff]
        %v262 = vld [vmem:[%s180 + $0x1a0] sm:$0xff]
        %v263 = vld [vmem:[%s180 + $0x1a8] sm:$0xff]
        %v264 = vld [vmem:[%s180 + $0x1b0] sm:$0xff]
        %v265 = vld [vmem:[%s180 + $0x1b8] sm:$0xff]
        %v266 = vld [vmem:[%s180 + $0x1c0] sm:$0xff]
        %v267 = vld [vmem:[%s180 + $0x1c8] sm:$0xff]
        %v268 = vld [vmem:[%s180 + $0x1d0] sm:$0xff]
        %v269 = vld [vmem:[%s180 + $0x1d8] sm:$0xff]
        %v270 = vld [vmem:[%s180 + $0x1e0] sm:$0xff]
        %v271 = vld [vmem:[%s180 + $0x1e8] sm:$0xff]
        %v272 = vld [vmem:[%s180 + $0x1f0] sm:$0xff]
        %v273 = vld [vmem:[%s180 + $0x1f8] sm:$0xff]
        %v274 = vmax.f32 %v210, 1e-06
        %v275 = vmax.f32 %v211, 1e-06
        %v276 = vmax.f32 %v212, 1e-06
        %v277 = vmax.f32 %v213, 1e-06
        %v278 = vmax.f32 %v214, 1e-06
        %v279 = vmax.f32 %v215, 1e-06
        %v280 = vmax.f32 %v216, 1e-06
        %v281 = vmax.f32 %v217, 1e-06
        %v282 = vmax.f32 %v218, 1e-06
        %v283 = vmax.f32 %v219, 1e-06
        %v284 = vmax.f32 %v220, 1e-06
        %v285 = vmax.f32 %v221, 1e-06
        %v286 = vmax.f32 %v222, 1e-06
        %v287 = vmax.f32 %v223, 1e-06
        %v288 = vmax.f32 %v224, 1e-06
        %v289 = vmax.f32 %v225, 1e-06
        %v290 = vmax.f32 %v226, 1e-06
        %v291 = vmax.f32 %v227, 1e-06
        %v292 = vmax.f32 %v228, 1e-06
        %v293 = vmax.f32 %v229, 1e-06
        %v294 = vmax.f32 %v230, 1e-06
        %v295 = vmax.f32 %v231, 1e-06
        %v296 = vmax.f32 %v232, 1e-06
        %v297 = vmax.f32 %v233, 1e-06
        %v298 = vmax.f32 %v234, 1e-06
        %v299 = vmax.f32 %v235, 1e-06
        %v300 = vmax.f32 %v236, 1e-06
        %v301 = vmax.f32 %v237, 1e-06
        %v302 = vmax.f32 %v238, 1e-06
        %v303 = vmax.f32 %v239, 1e-06
        %v304 = vmax.f32 %v240, 1e-06
        %v305 = vmax.f32 %v241, 1e-06
        %v306 = vmax.f32 %v242, 1e-06
        %v307 = vmax.f32 %v243, 1e-06
        %v308 = vmax.f32 %v244, 1e-06
        %v309 = vmax.f32 %v245, 1e-06
        %v310 = vmax.f32 %v246, 1e-06
        %v311 = vmax.f32 %v247, 1e-06
        %v312 = vmax.f32 %v248, 1e-06
        %v313 = vmax.f32 %v249, 1e-06
        %v314 = vmax.f32 %v250, 1e-06
        %v315 = vmax.f32 %v251, 1e-06
        %v316 = vmax.f32 %v252, 1e-06
        %v317 = vmax.f32 %v253, 1e-06
        %v318 = vmax.f32 %v254, 1e-06
        %v319 = vmax.f32 %v255, 1e-06
        %v320 = vmax.f32 %v256, 1e-06
        %v321 = vmax.f32 %v257, 1e-06
        %v322 = vmax.f32 %v258, 1e-06
        %v323 = vmax.f32 %v259, 1e-06
        %v324 = vmax.f32 %v260, 1e-06
        %v325 = vmax.f32 %v261, 1e-06
        %v326 = vmax.f32 %v262, 1e-06
        %v327 = vmax.f32 %v263, 1e-06
        %v328 = vmax.f32 %v264, 1e-06
        %v329 = vmax.f32 %v265, 1e-06
        %v330 = vmax.f32 %v266, 1e-06
        %v331 = vmax.f32 %v267, 1e-06
        %v332 = vmax.f32 %v268, 1e-06
        %v333 = vmax.f32 %v269, 1e-06
        %v334 = vmax.f32 %v270, 1e-06
        %v335 = vmax.f32 %v271, 1e-06
        %v336 = vmax.f32 %v272, 1e-06
        %v337 = vmax.f32 %v273, 1e-06
        %v338 = vmul.f32 %v274, %v274
        %v339 = vmul.f32 %v275, %v275
        %v340 = vmul.f32 %v276, %v276
        %v341 = vmul.f32 %v277, %v277
        %v342 = vmul.f32 %v278, %v278
        %v343 = vmul.f32 %v279, %v279
        %v344 = vmul.f32 %v280, %v280
        %v345 = vmul.f32 %v281, %v281
        %v346 = vmul.f32 %v282, %v282
        %v347 = vmul.f32 %v283, %v283
        %v348 = vmul.f32 %v284, %v284
        %v349 = vmul.f32 %v285, %v285
        %v350 = vmul.f32 %v286, %v286
        %v351 = vmul.f32 %v287, %v287
        %v352 = vmul.f32 %v288, %v288
        %v353 = vmul.f32 %v289, %v289
        %v354 = vmul.f32 %v290, %v290
        %v355 = vmul.f32 %v291, %v291
        %v356 = vmul.f32 %v292, %v292
        %v357 = vmul.f32 %v293, %v293
        %v358 = vmul.f32 %v294, %v294
        %v359 = vmul.f32 %v295, %v295
        %v360 = vmul.f32 %v296, %v296
        %v361 = vmul.f32 %v297, %v297
        %v362 = vmul.f32 %v298, %v298
        %v363 = vmul.f32 %v299, %v299
        %v364 = vmul.f32 %v300, %v300
        %v365 = vmul.f32 %v301, %v301
        %v366 = vmul.f32 %v302, %v302
        %v367 = vmul.f32 %v303, %v303
        %v368 = vmul.f32 %v304, %v304
        %v369 = vmul.f32 %v305, %v305
        %v370 = vmul.f32 %v306, %v306
        %v371 = vmul.f32 %v307, %v307
        %v372 = vmul.f32 %v308, %v308
        %v373 = vmul.f32 %v309, %v309
        %v374 = vmul.f32 %v310, %v310
        %v375 = vmul.f32 %v311, %v311
        %v376 = vmul.f32 %v312, %v312
        %v377 = vmul.f32 %v313, %v313
        %v378 = vmul.f32 %v314, %v314
        %v379 = vmul.f32 %v315, %v315
        %v380 = vmul.f32 %v316, %v316
        %v381 = vmul.f32 %v317, %v317
        %v382 = vmul.f32 %v318, %v318
        %v383 = vmul.f32 %v319, %v319
        %v384 = vmul.f32 %v320, %v320
        %v385 = vmul.f32 %v321, %v321
        %v386 = vmul.f32 %v322, %v322
        %v387 = vmul.f32 %v323, %v323
        %v388 = vmul.f32 %v324, %v324
        %v389 = vmul.f32 %v325, %v325
        %v390 = vmul.f32 %v326, %v326
        %v391 = vmul.f32 %v327, %v327
        %v392 = vmul.f32 %v328, %v328
        %v393 = vmul.f32 %v329, %v329
        %v394 = vmul.f32 %v330, %v330
        %v395 = vmul.f32 %v331, %v331
        %v396 = vmul.f32 %v332, %v332
        %v397 = vmul.f32 %v333, %v333
        %v398 = vmul.f32 %v334, %v334
        %v399 = vmul.f32 %v335, %v335
        %v400 = vmul.f32 %v336, %v336
        %v401 = vmul.f32 %v337, %v337
        %v402 = vmul.f32 %v338, %v274
        %v403 = vmul.f32 %v339, %v275
        %v404 = vmul.f32 %v340, %v276
        %v405 = vmul.f32 %v341, %v277
        %v406 = vmul.f32 %v342, %v278
        %v407 = vmul.f32 %v343, %v279
        %v408 = vmul.f32 %v344, %v280
        %v409 = vmul.f32 %v345, %v281
        %v410 = vmul.f32 %v346, %v282
        %v411 = vmul.f32 %v347, %v283
        %v412 = vmul.f32 %v348, %v284
        %v413 = vmul.f32 %v349, %v285
        %v414 = vmul.f32 %v350, %v286
        %v415 = vmul.f32 %v351, %v287
        %v416 = vmul.f32 %v352, %v288
        %v417 = vmul.f32 %v353, %v289
        %v418 = vmul.f32 %v354, %v290
        %v419 = vmul.f32 %v355, %v291
        %v420 = vmul.f32 %v356, %v292
        %v421 = vmul.f32 %v357, %v293
        %v422 = vmul.f32 %v358, %v294
        %v423 = vmul.f32 %v359, %v295
        %v424 = vmul.f32 %v360, %v296
        %v425 = vmul.f32 %v361, %v297
        %v426 = vmul.f32 %v362, %v298
        %v427 = vmul.f32 %v363, %v299
        %v428 = vmul.f32 %v364, %v300
        %v429 = vmul.f32 %v365, %v301
        %v430 = vmul.f32 %v366, %v302
        %v431 = vmul.f32 %v367, %v303
        %v432 = vmul.f32 %v368, %v304
        %v433 = vmul.f32 %v369, %v305
        %v434 = vmul.f32 %v370, %v306
        %v435 = vmul.f32 %v371, %v307
        %v436 = vmul.f32 %v372, %v308
        %v437 = vmul.f32 %v373, %v309
        %v438 = vmul.f32 %v374, %v310
        %v439 = vmul.f32 %v375, %v311
        %v440 = vmul.f32 %v376, %v312
        %v441 = vmul.f32 %v377, %v313
        %v442 = vmul.f32 %v378, %v314
        %v443 = vmul.f32 %v379, %v315
        %v444 = vmul.f32 %v380, %v316
        %v445 = vmul.f32 %v381, %v317
        %v446 = vmul.f32 %v382, %v318
        %v447 = vmul.f32 %v383, %v319
        %v448 = vmul.f32 %v384, %v320
        %v449 = vmul.f32 %v385, %v321
        %v450 = vmul.f32 %v386, %v322
        %v451 = vmul.f32 %v387, %v323
        %v452 = vmul.f32 %v388, %v324
        %v453 = vmul.f32 %v389, %v325
        %v454 = vmul.f32 %v390, %v326
        %v455 = vmul.f32 %v391, %v327
        %v456 = vmul.f32 %v392, %v328
        %v457 = vmul.f32 %v393, %v329
        %v458 = vmul.f32 %v394, %v330
        %v459 = vmul.f32 %v395, %v331
        %v460 = vmul.f32 %v396, %v332
        %v461 = vmul.f32 %v397, %v333
        %v462 = vmul.f32 %v398, %v334
        %v463 = vmul.f32 %v399, %v335
        %v464 = vmul.f32 %v400, %v336
        %v465 = vmul.f32 %v401, %v337
        %vm466 = vcmask 523264
        %v467 = vsel %vm466, %v402, 0.0
        %468 = vadd.xlane.f32.xlu0 %v467
        %v469 = vpop.xlane.xlu0 %468
        %v470 = vsel %vm466, %v403, 0.0
        %471 = vadd.xlane.f32.xlu0 %v470
        %v472 = vpop.xlane.xlu0 %471
        %v473 = vsel %vm466, %v404, 0.0
        %474 = vadd.xlane.f32.xlu0 %v473
        %v475 = vpop.xlane.xlu0 %474
        %v476 = vsel %vm466, %v405, 0.0
        %477 = vadd.xlane.f32.xlu0 %v476
        %v478 = vpop.xlane.xlu0 %477
        %v479 = vsel %vm466, %v406, 0.0
        %480 = vadd.xlane.f32.xlu0 %v479
        %v481 = vpop.xlane.xlu0 %480
        %v482 = vsel %vm466, %v407, 0.0
        %483 = vadd.xlane.f32.xlu0 %v482
        %v484 = vpop.xlane.xlu0 %483
        %v485 = vsel %vm466, %v408, 0.0
        %486 = vadd.xlane.f32.xlu0 %v485
        %v487 = vpop.xlane.xlu0 %486
        %v488 = vsel %vm466, %v409, 0.0
        %489 = vadd.xlane.f32.xlu0 %v488
        %v490 = vpop.xlane.xlu0 %489
        %v491 = vsel %vm466, %v410, 0.0
        %492 = vadd.xlane.f32.xlu0 %v491
        %v493 = vpop.xlane.xlu0 %492
        %v494 = vsel %vm466, %v411, 0.0
        %495 = vadd.xlane.f32.xlu0 %v494
        %v496 = vpop.xlane.xlu0 %495
        %v497 = vsel %vm466, %v412, 0.0
        %498 = vadd.xlane.f32.xlu0 %v497
        %v499 = vpop.xlane.xlu0 %498
        %v500 = vsel %vm466, %v413, 0.0
        %501 = vadd.xlane.f32.xlu0 %v500
        %v502 = vpop.xlane.xlu0 %501
        %v503 = vsel %vm466, %v414, 0.0
        %504 = vadd.xlane.f32.xlu0 %v503
        %v505 = vpop.xlane.xlu0 %504
        %v506 = vsel %vm466, %v415, 0.0
        %507 = vadd.xlane.f32.xlu0 %v506
        %v508 = vpop.xlane.xlu0 %507
        %v509 = vsel %vm466, %v416, 0.0
        %510 = vadd.xlane.f32.xlu0 %v509
        %v511 = vpop.xlane.xlu0 %510
        %v512 = vsel %vm466, %v417, 0.0
        %513 = vadd.xlane.f32.xlu0 %v512
        %v514 = vpop.xlane.xlu0 %513
        %v515 = vsel %vm466, %v418, 0.0
        %516 = vadd.xlane.f32.xlu0 %v515
        %v517 = vpop.xlane.xlu0 %516
        %v518 = vsel %vm466, %v419, 0.0
        %519 = vadd.xlane.f32.xlu0 %v518
        %v520 = vpop.xlane.xlu0 %519
        %v521 = vsel %vm466, %v420, 0.0
        %522 = vadd.xlane.f32.xlu0 %v521
        %v523 = vpop.xlane.xlu0 %522
        %v524 = vsel %vm466, %v421, 0.0
        %525 = vadd.xlane.f32.xlu0 %v524
        %v526 = vpop.xlane.xlu0 %525
        %v527 = vsel %vm466, %v422, 0.0
        %528 = vadd.xlane.f32.xlu0 %v527
        %v529 = vpop.xlane.xlu0 %528
        %v530 = vsel %vm466, %v423, 0.0
        %531 = vadd.xlane.f32.xlu0 %v530
        %v532 = vpop.xlane.xlu0 %531
        %v533 = vsel %vm466, %v424, 0.0
        %534 = vadd.xlane.f32.xlu0 %v533
        %v535 = vpop.xlane.xlu0 %534
        %v536 = vsel %vm466, %v425, 0.0
        %537 = vadd.xlane.f32.xlu0 %v536
        %v538 = vpop.xlane.xlu0 %537
        %v539 = vsel %vm466, %v426, 0.0
        %540 = vadd.xlane.f32.xlu0 %v539
        %v541 = vpop.xlane.xlu0 %540
        %v542 = vsel %vm466, %v427, 0.0
        %543 = vadd.xlane.f32.xlu0 %v542
        %v544 = vpop.xlane.xlu0 %543
        %v545 = vsel %vm466, %v428, 0.0
        %546 = vadd.xlane.f32.xlu0 %v545
        %v547 = vpop.xlane.xlu0 %546
        %v548 = vsel %vm466, %v429, 0.0
        %549 = vadd.xlane.f32.xlu0 %v548
        %v550 = vpop.xlane.xlu0 %549
        %v551 = vsel %vm466, %v430, 0.0
        %552 = vadd.xlane.f32.xlu0 %v551
        %v553 = vpop.xlane.xlu0 %552
        %v554 = vsel %vm466, %v431, 0.0
        %555 = vadd.xlane.f32.xlu0 %v554
        %v556 = vpop.xlane.xlu0 %555
        %v557 = vsel %vm466, %v432, 0.0
        %558 = vadd.xlane.f32.xlu0 %v557
        %v559 = vpop.xlane.xlu0 %558
        %v560 = vsel %vm466, %v433, 0.0
        %561 = vadd.xlane.f32.xlu0 %v560
        %v562 = vpop.xlane.xlu0 %561
        %v563 = vsel %vm466, %v434, 0.0
        %564 = vadd.xlane.f32.xlu0 %v563
        %v565 = vpop.xlane.xlu0 %564
        %v566 = vsel %vm466, %v435, 0.0
        %567 = vadd.xlane.f32.xlu0 %v566
        %v568 = vpop.xlane.xlu0 %567
        %v569 = vsel %vm466, %v436, 0.0
        %570 = vadd.xlane.f32.xlu0 %v569
        %v571 = vpop.xlane.xlu0 %570
        %v572 = vsel %vm466, %v437, 0.0
        %573 = vadd.xlane.f32.xlu0 %v572
        %v574 = vpop.xlane.xlu0 %573
        %v575 = vsel %vm466, %v438, 0.0
        %576 = vadd.xlane.f32.xlu0 %v575
        %v577 = vpop.xlane.xlu0 %576
        %v578 = vsel %vm466, %v439, 0.0
        %579 = vadd.xlane.f32.xlu0 %v578
        %v580 = vpop.xlane.xlu0 %579
        %v581 = vsel %vm466, %v440, 0.0
        %582 = vadd.xlane.f32.xlu0 %v581
        %v583 = vpop.xlane.xlu0 %582
        %v584 = vsel %vm466, %v441, 0.0
        %585 = vadd.xlane.f32.xlu0 %v584
        %v586 = vpop.xlane.xlu0 %585
        %v587 = vsel %vm466, %v442, 0.0
        %588 = vadd.xlane.f32.xlu0 %v587
        %v589 = vpop.xlane.xlu0 %588
        %v590 = vsel %vm466, %v443, 0.0
        %591 = vadd.xlane.f32.xlu0 %v590
        %v592 = vpop.xlane.xlu0 %591
        %v593 = vsel %vm466, %v444, 0.0
        %594 = vadd.xlane.f32.xlu0 %v593
        %v595 = vpop.xlane.xlu0 %594
        %v596 = vsel %vm466, %v445, 0.0
        %597 = vadd.xlane.f32.xlu0 %v596
        %v598 = vpop.xlane.xlu0 %597
        %v599 = vsel %vm466, %v446, 0.0
        %600 = vadd.xlane.f32.xlu0 %v599
        %v601 = vpop.xlane.xlu0 %600
        %v602 = vsel %vm466, %v447, 0.0
        %603 = vadd.xlane.f32.xlu0 %v602
        %v604 = vpop.xlane.xlu0 %603
        %v605 = vsel %vm466, %v448, 0.0
        %606 = vadd.xlane.f32.xlu0 %v605
        %v607 = vpop.xlane.xlu0 %606
        %v608 = vsel %vm466, %v449, 0.0
        %609 = vadd.xlane.f32.xlu0 %v608
        %v610 = vpop.xlane.xlu0 %609
        %v611 = vsel %vm466, %v450, 0.0
        %612 = vadd.xlane.f32.xlu0 %v611
        %v613 = vpop.xlane.xlu0 %612
        %v614 = vsel %vm466, %v451, 0.0
        %615 = vadd.xlane.f32.xlu0 %v614
        %v616 = vpop.xlane.xlu0 %615
        %v617 = vsel %vm466, %v452, 0.0
        %618 = vadd.xlane.f32.xlu0 %v617
        %v619 = vpop.xlane.xlu0 %618
        %v620 = vsel %vm466, %v453, 0.0
        %621 = vadd.xlane.f32.xlu0 %v620
        %v622 = vpop.xlane.xlu0 %621
        %v623 = vsel %vm466, %v454, 0.0
        %624 = vadd.xlane.f32.xlu0 %v623
        %v625 = vpop.xlane.xlu0 %624
        %v626 = vsel %vm466, %v455, 0.0
        %627 = vadd.xlane.f32.xlu0 %v626
        %v628 = vpop.xlane.xlu0 %627
        %v629 = vsel %vm466, %v456, 0.0
        %630 = vadd.xlane.f32.xlu0 %v629
        %v631 = vpop.xlane.xlu0 %630
        %v632 = vsel %vm466, %v457, 0.0
        %633 = vadd.xlane.f32.xlu0 %v632
        %v634 = vpop.xlane.xlu0 %633
        %v635 = vsel %vm466, %v458, 0.0
        %636 = vadd.xlane.f32.xlu0 %v635
        %v637 = vpop.xlane.xlu0 %636
        %v638 = vsel %vm466, %v459, 0.0
        %639 = vadd.xlane.f32.xlu0 %v638
        %v640 = vpop.xlane.xlu0 %639
        %v641 = vsel %vm466, %v460, 0.0
        %642 = vadd.xlane.f32.xlu0 %v641
        %v643 = vpop.xlane.xlu0 %642
        %v644 = vsel %vm466, %v461, 0.0
        %645 = vadd.xlane.f32.xlu0 %v644
        %v646 = vpop.xlane.xlu0 %645
        %v647 = vsel %vm466, %v462, 0.0
        %648 = vadd.xlane.f32.xlu0 %v647
        %v649 = vpop.xlane.xlu0 %648
        %v650 = vsel %vm466, %v463, 0.0
        %651 = vadd.xlane.f32.xlu0 %v650
        %v652 = vpop.xlane.xlu0 %651
        %v653 = vsel %vm466, %v464, 0.0
        %654 = vadd.xlane.f32.xlu0 %v653
        %v655 = vpop.xlane.xlu0 %654
        %v656 = vsel %vm466, %v465, 0.0
        %657 = vadd.xlane.f32.xlu0 %v656
        %v658 = vpop.xlane.xlu0 %657
        %v659 = vrcp.pop 64.0
        %v660 = vmul.f32 64.0, %v659
        %v661 = vsub.f32 1.0, %v660
        %v662 = vmul.f32 %v659, %v661
        %v663 = vadd.f32 %v659, %v662
        %vm664 = vweird.f32 %v659
        %v665 = vsel %vm664, %v659, %v663
        %v666 = vmul.f32 %v469, %v665
        %v667 = vmul.f32 %v472, %v665
        %v668 = vmul.f32 %v475, %v665
        %v669 = vmul.f32 %v478, %v665
        %v670 = vmul.f32 %v481, %v665
        %v671 = vmul.f32 %v484, %v665
        %v672 = vmul.f32 %v487, %v665
        %v673 = vmul.f32 %v490, %v665
        %v674 = vmul.f32 %v493, %v665
        %v675 = vmul.f32 %v496, %v665
        %v676 = vmul.f32 %v499, %v665
        %v677 = vmul.f32 %v502, %v665
        %v678 = vmul.f32 %v505, %v665
        %v679 = vmul.f32 %v508, %v665
        %v680 = vmul.f32 %v511, %v665
        %v681 = vmul.f32 %v514, %v665
        %v682 = vmul.f32 %v517, %v665
        %v683 = vmul.f32 %v520, %v665
        %v684 = vmul.f32 %v523, %v665
        %v685 = vmul.f32 %v526, %v665
        %v686 = vmul.f32 %v529, %v665
        %v687 = vmul.f32 %v532, %v665
        %v688 = vmul.f32 %v535, %v665
        %v689 = vmul.f32 %v538, %v665
        %v690 = vmul.f32 %v541, %v665
        %v691 = vmul.f32 %v544, %v665
        %v692 = vmul.f32 %v547, %v665
        %v693 = vmul.f32 %v550, %v665
        %v694 = vmul.f32 %v553, %v665
        %v695 = vmul.f32 %v556, %v665
        %v696 = vmul.f32 %v559, %v665
        %v697 = vmul.f32 %v562, %v665
        %v698 = vmul.f32 %v565, %v665
        %v699 = vmul.f32 %v568, %v665
        %v700 = vmul.f32 %v571, %v665
        %v701 = vmul.f32 %v574, %v665
        %v702 = vmul.f32 %v577, %v665
        %v703 = vmul.f32 %v580, %v665
        %v704 = vmul.f32 %v583, %v665
        %v705 = vmul.f32 %v586, %v665
        %v706 = vmul.f32 %v589, %v665
        %v707 = vmul.f32 %v592, %v665
        %v708 = vmul.f32 %v595, %v665
        %v709 = vmul.f32 %v598, %v665
        %v710 = vmul.f32 %v601, %v665
        %v711 = vmul.f32 %v604, %v665
        %v712 = vmul.f32 %v607, %v665
        %v713 = vmul.f32 %v610, %v665
        %v714 = vmul.f32 %v613, %v665
        %v715 = vmul.f32 %v616, %v665
        %v716 = vmul.f32 %v619, %v665
        %v717 = vmul.f32 %v622, %v665
        %v718 = vmul.f32 %v625, %v665
        %v719 = vmul.f32 %v628, %v665
        %v720 = vmul.f32 %v631, %v665
        %v721 = vmul.f32 %v634, %v665
        %v722 = vmul.f32 %v637, %v665
        %v723 = vmul.f32 %v640, %v665
        %v724 = vmul.f32 %v643, %v665
        %v725 = vmul.f32 %v646, %v665
        %v726 = vmul.f32 %v649, %v665
        %v727 = vmul.f32 %v652, %v665
        %v728 = vmul.f32 %v655, %v665
        %v729 = vmul.f32 %v658, %v665
        %v730 = vpow.f32 %v666, 0.33333334
        %v731 = vpow.f32 %v667, 0.33333334
        %v732 = vpow.f32 %v668, 0.33333334
        %v733 = vpow.f32 %v669, 0.33333334
        %v734 = vpow.f32 %v670, 0.33333334
        %v735 = vpow.f32 %v671, 0.33333334
        %v736 = vpow.f32 %v672, 0.33333334
        %v737 = vpow.f32 %v673, 0.33333334
        %v738 = vpow.f32 %v674, 0.33333334
        %v739 = vpow.f32 %v675, 0.33333334
        %v740 = vpow.f32 %v676, 0.33333334
        %v741 = vpow.f32 %v677, 0.33333334
        %v742 = vpow.f32 %v678, 0.33333334
        %v743 = vpow.f32 %v679, 0.33333334
        %v744 = vpow.f32 %v680, 0.33333334
        %v745 = vpow.f32 %v681, 0.33333334
        %v746 = vpow.f32 %v682, 0.33333334
        %v747 = vpow.f32 %v683, 0.33333334
        %v748 = vpow.f32 %v684, 0.33333334
        %v749 = vpow.f32 %v685, 0.33333334
        %v750 = vpow.f32 %v686, 0.33333334
        %v751 = vpow.f32 %v687, 0.33333334
        %v752 = vpow.f32 %v688, 0.33333334
        %v753 = vpow.f32 %v689, 0.33333334
        %v754 = vpow.f32 %v690, 0.33333334
        %v755 = vpow.f32 %v691, 0.33333334
        %v756 = vpow.f32 %v692, 0.33333334
        %v757 = vpow.f32 %v693, 0.33333334
        %v758 = vpow.f32 %v694, 0.33333334
        %v759 = vpow.f32 %v695, 0.33333334
        %v760 = vpow.f32 %v696, 0.33333334
        %v761 = vpow.f32 %v697, 0.33333334
        %v762 = vpow.f32 %v698, 0.33333334
        %v763 = vpow.f32 %v699, 0.33333334
        %v764 = vpow.f32 %v700, 0.33333334
        %v765 = vpow.f32 %v701, 0.33333334
        %v766 = vpow.f32 %v702, 0.33333334
        %v767 = vpow.f32 %v703, 0.33333334
        %v768 = vpow.f32 %v704, 0.33333334
        %v769 = vpow.f32 %v705, 0.33333334
        %v770 = vpow.f32 %v706, 0.33333334
        %v771 = vpow.f32 %v707, 0.33333334
        %v772 = vpow.f32 %v708, 0.33333334
        %v773 = vpow.f32 %v709, 0.33333334
        %v774 = vpow.f32 %v710, 0.33333334
        %v775 = vpow.f32 %v711, 0.33333334
        %v776 = vpow.f32 %v712, 0.33333334
        %v777 = vpow.f32 %v713, 0.33333334
        %v778 = vpow.f32 %v714, 0.33333334
        %v779 = vpow.f32 %v715, 0.33333334
        %v780 = vpow.f32 %v716, 0.33333334
        %v781 = vpow.f32 %v717, 0.33333334
        %v782 = vpow.f32 %v718, 0.33333334
        %v783 = vpow.f32 %v719, 0.33333334
        %v784 = vpow.f32 %v720, 0.33333334
        %v785 = vpow.f32 %v721, 0.33333334
        %v786 = vpow.f32 %v722, 0.33333334
        %v787 = vpow.f32 %v723, 0.33333334
        %v788 = vpow.f32 %v724, 0.33333334
        %v789 = vpow.f32 %v725, 0.33333334
        %v790 = vpow.f32 %v726, 0.33333334
        %v791 = vpow.f32 %v727, 0.33333334
        %v792 = vpow.f32 %v728, 0.33333334
        %v793 = vpow.f32 %v729, 0.33333334
        %v794 = vld [vmem:[#allocation5] sm:$0xff]
        %v795 = vld [vmem:[#allocation5 + $0x8] sm:$0xff]
        %v796 = vld [vmem:[#allocation5 + $0x10] sm:$0xff]
        %v797 = vld [vmem:[#allocation5 + $0x18] sm:$0xff]
        %v798 = vld [vmem:[#allocation5 + $0x20] sm:$0xff]
        %v799 = vld [vmem:[#allocation5 + $0x28] sm:$0xff]
        %v800 = vld [vmem:[#allocation5 + $0x30] sm:$0xff]
        %v801 = vld [vmem:[#allocation5 + $0x38] sm:$0xff]
        %v802 = vld [vmem:[%s2] sm:$0x1]
        %v804 = vperm.slane %v802, 0
        %v870 = vlaneseq
        %v871 = vand.u32 %v870, 127
        %v872 = vperm.slane %v730, %v871
        %v873 = vadd.s32 %v871, 4294967288
        %v874 = vperm.slane %v731, %v873
        %vm875 = vcmask 130112
        %v876 = vsel %vm875, %v874, %v872
        %v877 = vadd.s32 %v871, 4294967280
        %v878 = vperm.slane %v732, %v877
        %vm879 = vcmask 195712
        %v880 = vsel %vm879, %v878, %v876
        %v881 = vadd.s32 %v871, 4294967272
        %v882 = vperm.slane %v733, %v881
        %vm883 = vcmask 261312
        %v884 = vsel %vm883, %v882, %v880
        %v885 = vadd.s32 %v871, 4294967264
        %v886 = vperm.slane %v734, %v885
        %vm887 = vcmask 326912
        %v888 = vsel %vm887, %v886, %v884
        %v889 = vadd.s32 %v871, 4294967256
        %v890 = vperm.slane %v735, %v889
        %vm891 = vcmask 392512
        %v892 = vsel %vm891, %v890, %v888
        %v893 = vadd.s32 %v871, 4294967248
        %v894 = vperm.slane %v736, %v893
        %vm895 = vcmask 458112
        %v896 = vsel %vm895, %v894, %v892
        %v897 = vadd.s32 %v871, 4294967240
        %v898 = vperm.slane %v737, %v897
        %vm899 = vcmask 523712
        %v900 = vsel %vm899, %v898, %v896
        %v901 = vperm.slane %v738, %v871
        %v902 = vperm.slane %v739, %v873
        %v903 = vsel %vm875, %v902, %v901
        %v904 = vperm.slane %v740, %v877
        %v905 = vsel %vm879, %v904, %v903
        %v906 = vperm.slane %v741, %v881
        %v907 = vsel %vm883, %v906, %v905
        %v908 = vperm.slane %v742, %v885
        %v909 = vsel %vm887, %v908, %v907
        %v910 = vperm.slane %v743, %v889
        %v911 = vsel %vm891, %v910, %v909
        %v912 = vperm.slane %v744, %v893
        %v913 = vsel %vm895, %v912, %v911
        %v914 = vperm.slane %v745, %v897
        %v915 = vsel %vm899, %v914, %v913
        %v916 = vperm.slane %v746, %v871
        %v917 = vperm.slane %v747, %v873
        %v918 = vsel %vm875, %v917, %v916
        %v919 = vperm.slane %v748, %v877
        %v920 = vsel %vm879, %v919, %v918
        %v921 = vperm.slane %v749, %v881
        %v922 = vsel %vm883, %v921, %v920
        %v923 = vperm.slane %v750, %v885
        %v924 = vsel %vm887, %v923, %v922
        %v925 = vperm.slane %v751, %v889
        %v926 = vsel %vm891, %v925, %v924
        %v927 = vperm.slane %v752, %v893
        %v928 = vsel %vm895, %v927, %v926
        %v929 = vperm.slane %v753, %v897
        %v930 = vsel %vm899, %v929, %v928
        %v931 = vperm.slane %v754, %v871
        %v932 = vperm.slane %v755, %v873
        %v933 = vsel %vm875, %v932, %v931
        %v934 = vperm.slane %v756, %v877
        %v935 = vsel %vm879, %v934, %v933
        %v936 = vperm.slane %v757, %v881
        %v937 = vsel %vm883, %v936, %v935
        %v938 = vperm.slane %v758, %v885
        %v939 = vsel %vm887, %v938, %v937
        %v940 = vperm.slane %v759, %v889
        %v941 = vsel %vm891, %v940, %v939
        %v942 = vperm.slane %v760, %v893
        %v943 = vsel %vm895, %v942, %v941
        %v944 = vperm.slane %v761, %v897
        %v945 = vsel %vm899, %v944, %v943
        %v946 = vperm.slane %v762, %v871
        %v947 = vperm.slane %v763, %v873
        %v948 = vsel %vm875, %v947, %v946
        %v949 = vperm.slane %v764, %v877
        %v950 = vsel %vm879, %v949, %v948
        %v951 = vperm.slane %v765, %v881
        %v952 = vsel %vm883, %v951, %v950
        %v953 = vperm.slane %v766, %v885
        %v954 = vsel %vm887, %v953, %v952
        %v955 = vperm.slane %v767, %v889
        %v956 = vsel %vm891, %v955, %v954
        %v957 = vperm.slane %v768, %v893
        %v958 = vsel %vm895, %v957, %v956
        %v959 = vperm.slane %v769, %v897
        %v960 = vsel %vm899, %v959, %v958
        %v961 = vperm.slane %v770, %v871
        %v962 = vperm.slane %v771, %v873
        %v963 = vsel %vm875, %v962, %v961
        %v964 = vperm.slane %v772, %v877
        %v965 = vsel %vm879, %v964, %v963
        %v966 = vperm.slane %v773, %v881
        %v967 = vsel %vm883, %v966, %v965
        %v968 = vperm.slane %v774, %v885
        %v969 = vsel %vm887, %v968, %v967
        %v970 = vperm.slane %v775, %v889
        %v971 = vsel %vm891, %v970, %v969
        %v972 = vperm.slane %v776, %v893
        %v973 = vsel %vm895, %v972, %v971
        %v974 = vperm.slane %v777, %v897
        %v975 = vsel %vm899, %v974, %v973
        %v976 = vperm.slane %v778, %v871
        %v977 = vperm.slane %v779, %v873
        %v978 = vsel %vm875, %v977, %v976
        %v979 = vperm.slane %v780, %v877
        %v980 = vsel %vm879, %v979, %v978
        %v981 = vperm.slane %v781, %v881
        %v982 = vsel %vm883, %v981, %v980
        %v983 = vperm.slane %v782, %v885
        %v984 = vsel %vm887, %v983, %v982
        %v985 = vperm.slane %v783, %v889
        %v986 = vsel %vm891, %v985, %v984
        %v987 = vperm.slane %v784, %v893
        %v988 = vsel %vm895, %v987, %v986
        %v989 = vperm.slane %v785, %v897
        %v990 = vsel %vm899, %v989, %v988
        %v991 = vperm.slane %v786, %v871
        %v992 = vperm.slane %v787, %v873
        %v993 = vsel %vm875, %v992, %v991
        %v994 = vperm.slane %v788, %v877
        %v995 = vsel %vm879, %v994, %v993
        %v996 = vperm.slane %v789, %v881
        %v997 = vsel %vm883, %v996, %v995
        %v998 = vperm.slane %v790, %v885
        %v999 = vsel %vm887, %v998, %v997
        %v1000 = vperm.slane %v791, %v889
        %v1001 = vsel %vm891, %v1000, %v999
        %v1002 = vperm.slane %v792, %v893
        %v1003 = vsel %vm895, %v1002, %v1001
        %v1004 = vperm.slane %v793, %v897
        %v1005 = vsel %vm899, %v1004, %v1003
        %vm1006 = vcmask 1041409
        %v1007 = vsel %vm1006, %v915, %v900
        %vm1008 = vcmask 1042434
        %v1009 = vsel %vm1008, %v930, %v1007
        %vm1010 = vcmask 1043459
        %v1011 = vsel %vm1010, %v945, %v1009
        %vm1012 = vcmask 1044484
        %v1013 = vsel %vm1012, %v960, %v1011
        %vm1014 = vcmask 1045509
        %v1015 = vsel %vm1014, %v975, %v1013
        %vm1016 = vcmask 1046534
        %v1017 = vsel %vm1016, %v990, %v1015
        %vm1018 = vcmask 1047559
        %v1019 = vsel %vm1018, %v1005, %v1017
        %v1020 = vsel %vm466, %v1019, 0
        %1022 = vmatpush.msra.mxu0 0.0
        %1023 = vmatpush.msra.mxu0 0.0
        %1024 = vmatpush.msra.mxu0 0.0
        %1025 = vmatpush.msra.mxu0 0.0
        %1026 = vmatpush.msra.mxu0 0.0
        %1027 = vmatpush.msra.mxu0 0.0
        %1028 = vmatpush.msra.mxu0 0.0
        %1029 = vmatpush.msra.mxu0 0.0
        %1030 = vmatpush.msra.mxu0 %v801
        %1031 = vmatpush.msra.mxu0 %v800
        %1032 = vmatpush.msra.mxu0 %v799
        %1033 = vmatpush.msra.mxu0 %v798
        %1034 = vmatpush.msra.mxu0 %v797
        %1035 = vmatpush.msra.mxu0 %v796
        %1036 = vmatpush.msra.mxu0 %v795
        %1037 = vmatpush.msra.mxu0 %v794
        %1038 = vmatmul.f32.gmra.mxu0 %v1020
        %v1039 = vpop.f32.mrf.mxu0
        %v1040 = vadd.f32 %v804, %v1039
        %1041 = vdwg.mxu0
        %v1042 = vmul.f32 %v1040, %v1040
        %1043 = vadd.xlane.f32.xlu0 %v1042
        %v1044 = vpop.xlane.xlu0 %1043
        %v1045 = vrsqrt.pop %v1044
        %v1046 = vmul.f32 %v1045, %v1044
        %v1047 = vmul.f32 %v1046, %v1045
        %v1048 = vmul.f32 0.5, %v1047
        %v1049 = vsub.f32 1.5, %v1048
        %v1050 = vmul.f32 %v1045, %v1049
        %v1051 = vmul.f32 %v1044, %v1050
        %vm1052 = vcmp.eq.f32.partialorder %v1044, inf
        %v1053 = vsel %vm1052, %v1044, %v1051
        %vm1054 = vcmp.eq.f32.partialorder %v1044, 0.0
        %v1055 = vand.u32 %v1044, 2147483648
        %v1056 = vsel %vm1054, %v1055, %v1053
        %v1057 = vmax.f32 %v1056, 1e-12
        %v1058 = vrcp.pop %v1057
        %v1059 = vmul.f32 %v1057, %v1058
        %v1060 = vsub.f32 1.0, %v1059
        %v1061 = vmul.f32 %v1058, %v1060
        %v1062 = vadd.f32 %v1058, %v1061
        %vm1063 = vweird.f32 %v1057
        %vm1064 = vweird.f32 %v1058
        %vm1065 = vmor %vm1063, %vm1064
        %v1066 = vsel %vm1065, %v1058, %v1062
        %v1067 = vand.u32 2147483647, %v1057
        %vm1068 = vcmp.eq.f32.partialorder %v1067, 8.507059e+37
        %v1069 = vand.u32 %v1057, 2147483648
        %v1070 = vor.u32 1.1754944e-38, %v1069
        %v1071 = vsel %vm1068, %v1070, %v1066
        %v1072 = vmul.f32 %v1040, %v1071
        %v1073 = vpack.c.bf16 %v1072, %v1072
        %1074 = vst [vmem:[%s208] sm:$0xf] %v1073
        %s1075 = sand.u32 %s97, 1
        %s1076 = scalar_lea.sflag [#allocation4], %s1075
        %s1077 = sand.u32 %s97, 1
        %s1078 = smul.addr %s1077, 4
        %s1079 = scalar_lea.vmem [#allocation7], %s1078
        // Predicated region
        $region41: #{tpu_custom_call.1} parent=31 // pred_check
          %p1080 = pneg %p107
        $region42: #{tpu_custom_call.1} parent=31 // pred_check_branch
          %1082 = sbr.rel (%p1080) target = $region44
        $region43: #{tpu_custom_call.1} parent=31 // pred_region
          %1084 = vsyncadd %s1076, 0
          %s1085 = smul.addr %s21, 4
          %s1086 = scalar_lea.hbm %s3, %s1085
          %s1088 = sshll.u32 %s1079, 4
          %s1089 = int_to_ptr.vmem [resolvable:$true] %s1088
          %s1090 = sshll.u32 %s1086, 4
          %s1091 = int_to_ptr.hbm [resolvable:$true] %s1090
          %1093 = dma.vmem_to_hbm [thread:$0]  %s1089, 64, %s1091, %s1076
        $region44: #{tpu_custom_call.1} parent=31 // pred_fallthru
          _
      $region32: #{tpu_custom_call.1} parent=5 // pred_fallthru
        _
      %p1094 = scmp.le.s32.totalorder 2, %s16
      // Predicated region
      $region45: #{tpu_custom_call.1} parent=5 // pred_check
        %p1095 = pneg %p1094
      $region46: #{tpu_custom_call.1} parent=5 // pred_check_branch
        %1097 = sbr.rel (%p1095) target = $region48
      $region47: #{tpu_custom_call.1} parent=5 // pred_region
        %s1098 = ssub.s32 %s16, 2
        // Predicated region
        $region49: #{tpu_custom_call.1} parent=47 // pred_check
          %p1099 = pneg %p113
        $region50: #{tpu_custom_call.1} parent=47 // pred_check_branch
          %1101 = sbr.rel (%p1099) target = $region52
        $region51: #{tpu_custom_call.1} parent=47 // pred_region
          %s1102 = sand.u32 %s98, 1
          %s1103 = scalar_lea.sflag [#allocation4], %s1102
          %s1104 = sand.u32 %s98, 1
          %s1105 = smul.addr %s1104, 4
          %s1106 = scalar_lea.vmem [#allocation7], %s1105
          %1108 = dma.done %s1103, 64
        $region52: #{tpu_custom_call.1} parent=47 // pred_fallthru
          _
      $region48: #{tpu_custom_call.1} parent=5 // pred_fallthru
        _
    $region6: #{tpu_custom_call.1} parent=1 // loop_footer
      %s20 = sadd.s32 1, %s16
    $region7: #{tpu_custom_call.1} parent=1 // loop_footer_branch
      %15 = sbr.rel target = $region3
    $region8: #{tpu_custom_call.1} parent=1 // loop_exit
      _
    %1109 = vsyncpa [#allocation3], 1
    %s1110 = scalar_lea.sflag [#allocation3], 1
    %1111 = vsyncpa %s1110, 1
    %1112 = vsyncpa [#allocation6], 1
    %1113 = vsyncpa [#allocation4], 1
    %s1114 = scalar_lea.sflag [#allocation4], 1
    %1115 = vsyncpa %s1114, 1

</llo_original>
